<compile_context>
chip_gen: v7x
topology: tpu7x:2x2x1
jax: 0.10.0
libtpu: 0.0.40
codegen_flags: <defaults>
</compile_context>

<pallas_src>
import functools

import jax
import jax.numpy as jnp
from jax.experimental import pallas as pl
from jax.experimental.pallas import tpu as pltpu


# ---------------------------------------------------------------------------
# Fused kernel: [conv3x3 (single GEMM) + bias + ReLU] x n_layers, VMEM-resident.
# Activations: (C, Lb) with Lb = images_per_block * PPs, PPs = ceil(Hp*Wp/128)*128,
# flat index inside an image = yp * Wp + xp on the zero-padded (Hp, Wp) grid.
# ---------------------------------------------------------------------------
def make_fused_kernel(couts, Wp, Lb, ksize, pad):
    # tap (di, dj) reads padded[y+di, x+dj] for output written at (y+pad, x+pad):
    # a pure lane shift of (di-pad)*Wp + (dj-pad) on the flat spatial axis.
    offsets = [(di - pad) * Wp + (dj - pad)
               for di in range(ksize) for dj in range(ksize)]
    n_layers = len(couts)

    def kernel(*refs):
        x_ref, mask_ref = refs[0], refs[1]
        o_ref = refs[-1]
        mask = mask_ref[...]                    # (1, Lb) f32; 1.0 on interior pixels
        a = x_ref[...]                          # (Cin, Lb) f32; padding ring is 0

        for li, cout in enumerate(couts):
            w_ref = refs[2 + 2 * li]            # (cout, k*k*cin) bf16, tap-major cols
            b_ref = refs[3 + 2 * li]            # (cout, 1) f32 bias

            # Stack the k*k spatially shifted copies of the activation along
            # the contraction axis -> ONE MXU GEMM per layer (K = k*k*cin).
            stacked = jnp.concatenate(
                [a if off == 0 else pltpu.roll(a, shift=(-off) % Lb, axis=1)
                 for off in offsets], axis=0)                   # (k*k*cin, Lb) f32
            acc = jnp.dot(w_ref[...], stacked.astype(jnp.bfloat16),
                          preferred_element_type=jnp.float32)   # (cout, Lb) f32

            a = jnp.maximum(acc + b_ref[...], 0.0)              # bias + ReLU (f32)
            if li < n_layers - 1:
                # zero the ring / tail so it acts as the next conv's zero padding
                a = a * mask

        # Final layer's ring/tail lanes hold wrapped garbage; cropped in wrapper.
        o_ref[...] = a.astype(o_ref.dtype)

    return kernel


# ---------------------------------------------------------------------------
# Hoisted, shape-only constants (done once per model / shape, not per call)
# ---------------------------------------------------------------------------
def prepare_conv_params(params, kernel_size):
    """Stack (Cout,Cin,k,k) weights into (Cout, k*k*Cin) bf16 GEMM operands
    (tap-major columns, matching the in-kernel roll/concat order) and biases
    into f32 column vectors.  Call ONCE per model."""
    prepared = []
    for (w, b) in params:
        cout, cin, kh, kw = w.shape
        assert kh == kernel_size and kw == kernel_size
        w_s = jnp.transpose(w, (0, 2, 3, 1)).reshape(cout, kh * kw * cin)
        prepared.append((w_s.astype(jnp.bfloat16),
                         b.reshape(cout, 1).astype(jnp.float32)))
    return prepared


@functools.lru_cache(maxsize=None)
def _interior_mask(H, W, pad, PPs, ipb):
    """(1, ipb*PPs) f32 mask: 1.0 on interior (non-padding) pixels, else 0."""
    Wp = W + 2 * pad
    PP = (H + 2 * pad) * Wp
    idx = jnp.arange(PPs, dtype=jnp.int32)
    yy, xx = idx // Wp, idx % Wp
    valid = ((idx < PP) & (yy >= pad) & (yy < pad + H)
             & (xx >= pad) & (xx < pad + W))
    return jnp.tile(valid.astype(jnp.float32), (ipb,)).reshape(1, ipb * PPs)


def _choose_images_per_block(N, PPs, target_lanes=1024):
    """Lane-dense blocks of whole images; keep >=2 grid steps when possible so
    v7x's two TensorCores each get work (dimension_semantics=('parallel',))."""
    ipb = max(1, min(N, target_lanes // PPs))
    while N % ipb:
        ipb -= 1
    if N >= 2 and N // ipb < 2:
        divisors = [d for d in range(1, N) if N % d == 0]
        ipb = max(divisors) if divisors else 1
    return ipb


# ---------------------------------------------------------------------------
# Full SimpleConvNet forward (conv stack + flatten)
# ---------------------------------------------------------------------------
def simple_conv_net_forward(x_nchw, prepared_params, *, kernel_size=3, stride=1,
                            pad=1, dilation=1, images_per_block=None):
    """x_nchw: (N, Cin, H, W). prepared_params: output of prepare_conv_params."""
    assert stride == 1 and dilation == 1 and pad == kernel_size // 2, \
        "fused kernel implements the realized stride-1 / same-padding config"

    N, Cin, H, W = x_nchw.shape
    Hp, Wp = H + 2 * pad, W + 2 * pad
    PP = Hp * Wp                               # flat padded-grid size per image
    PPs = pl.cdiv(PP, 128) * 128               # lane-dense per-image stride
    max_off = pad * Wp + pad
    # Roll-based taps must only wrap into the masked ring / lane tail:
    assert PP + max_off <= PPs, "per-image lane stride too small for roll taps"

    ipb = images_per_block or _choose_images_per_block(N, PPs)
    assert N % ipb == 0, "images_per_block must divide the batch size"
    Lb = ipb * PPs
    n_blocks = N // ipb
    L = N * PPs

    # ---- per-call input layout: (Cin, N*PPs), zero ring + zero tail per image
    xp = jnp.pad(x_nchw, ((0, 0), (0, 0), (pad, pad), (pad, pad)))   # (N,Cin,Hp,Wp)
    xf = jnp.pad(xp.reshape(N, Cin, PP), ((0, 0), (0, 0), (0, PPs - PP)))
    xf = jnp.transpose(xf, (1, 0, 2)).reshape(Cin, L).astype(jnp.float32)

    mask = _interior_mask(H, W, pad, PPs, ipb)   # cached per shape

    couts = [w.shape[0] for (w, _) in prepared_params]
    C_last = couts[-1]
    KK = kernel_size * kernel_size

    args = [xf, mask]
    in_specs = [
        pl.BlockSpec((Cin, Lb), lambda i: (0, i)),   # batch-blocked activations
        pl.BlockSpec((1, Lb), lambda i: (0, 0)),     # mask, same block every step
    ]
    c_prev = Cin
    for (w_s, b_c) in prepared_params:
        cout = w_s.shape[0]
        args += [w_s, b_c]
        in_specs += [
            pl.BlockSpec((cout, KK * c_prev), lambda i: (0, 0)),
            pl.BlockSpec((cout, 1), lambda i: (0, 0)),
        ]
        c_prev = cout

    kernel = make_fused_kernel(couts, Wp, Lb, kernel_size, pad)

    out = pl.pallas_call(
        kernel,
        out_shape=jax.ShapeDtypeStruct((C_last, L), jnp.float32),
        grid=(n_blocks,),
        in_specs=in_specs,
        out_specs=pl.BlockSpec((C_last, Lb), lambda i: (0, i)),
        compiler_params=pltpu.CompilerParams(
            dimension_semantics=("parallel",)),
    )(*args)

    # ---- single tiny extraction to PyTorch nn.Flatten() order (N, C*H*W) ----
    out = out.reshape(C_last, N, PPs)[:, :, :PP].reshape(C_last, N, Hp, Wp)
    out = out[:, :, pad:pad + H, pad:pad + W]                 # (C_last, N, H, W)
    return jnp.transpose(out, (1, 0, 2, 3)).reshape(N, C_last * H * W)


def init_params(key, n_input_channels, out_channels, kernel_size):
    """Deterministic init matching PyTorch Conv2d weight/bias shapes."""
    params = []
    c_in = n_input_channels
    for c_out in out_channels:
        key, kw_, kb_ = jax.random.split(key, 3)
        fan_in = c_in * kernel_size * kernel_size
        bound = 1.0 / jnp.sqrt(fan_in)
        w = jax.random.uniform(kw_, (c_out, c_in, kernel_size, kernel_size),
                               jnp.float32, -bound, bound)
        b = jax.random.uniform(kb_, (c_out,), jnp.float32, -bound, bound)
        params.append((w, b))
        c_in = c_out
    return params


if __name__ == "__main__":
    key = jax.random.PRNGKey(0)
    k_x, k_p = jax.random.split(key)

    # Small shapes consistent with the module: NCHW input.
    N, C_IN, H, W = 2, 4, 16, 16
    OUT_CHANNELS = [8, 16]
    KSIZE = 3
    PAD = 1

    x = jax.random.normal(k_x, (N, C_IN, H, W), jnp.float32)
    params = init_params(k_p, C_IN, OUT_CHANNELS, KSIZE)

    # Hoisted once: stacked bf16 GEMM weights + column biases.
    prepared = prepare_conv_params(params, KSIZE)
    fwd = jax.jit(lambda xx: simple_conv_net_forward(
        xx, prepared, kernel_size=KSIZE, stride=1, pad=PAD))

    y = jax.block_until_ready(fwd(x))

    # Sanity: flatten of (N, 16, 16, 16) -> (N, 4096), ReLU applied.
    assert y.shape == (N, OUT_CHANNELS[-1] * H * W), y.shape
    assert bool(jnp.all(y >= 0.0))

    # Cross-check vs. plain-JAX reference with matching precision
    # (bf16 GEMM operands, f32 accumulation, f32 bias/ReLU).
    def ref_forward(xx, ps):
        h = xx
        for (w, b) in ps:
            h = jax.lax.conv_general_dilated(
                h.astype(jnp.bfloat16), w.astype(jnp.bfloat16),
                window_strides=(1, 1), padding=((PAD, PAD), (PAD, PAD)),
                dimension_numbers=("NCHW", "OIHW", "NCHW"),
                preferred_element_type=jnp.float32)
            h = jnp.maximum(h + b[None, :, None, None], 0.0)
        return h.reshape(h.shape[0], -1)

    y_ref = ref_forward(x, params)
    max_err = float(jnp.max(jnp.abs(y - y_ref)))
    assert jnp.allclose(y, y_ref, atol=5e-3, rtol=5e-3), max_err

    print("KERNEL_OK")
</pallas_src>

<mosaic_0001>
module attributes {stable_mosaic.version = 11 : i64} {
  func.func @kernel(%arg0: i32, %arg1: memref<4x384xf32, #tpu.memory_space<vmem>>, %arg2: memref<1x384xf32, #tpu.memory_space<vmem>>, %arg3: memref<8x36xbf16, #tpu.memory_space<vmem>>, %arg4: memref<8x1xf32, #tpu.memory_space<vmem>>, %arg5: memref<16x72xbf16, #tpu.memory_space<vmem>>, %arg6: memref<16x1xf32, #tpu.memory_space<vmem>>, %arg7: memref<16x384xf32, #tpu.memory_space<vmem>>) attributes {dimension_semantics = [#tpu.dimension_semantics<parallel>], iteration_bounds = array<i64: 2>, scalar_prefetch = 0 : i64, scratch_operands = 0 : i64, tpu.core_type = #tpu.core_type<tc>, window_params = [{transform_indices = @transform_0, window_bounds = array<i64: 4, 384>}, {pipeline_mode = #tpu.pipeline_mode<synchronous>, transform_indices = @transform_1, window_bounds = array<i64: 1, 384>}, {pipeline_mode = #tpu.pipeline_mode<synchronous>, transform_indices = @transform_2, window_bounds = array<i64: 8, 36>}, {pipeline_mode = #tpu.pipeline_mode<synchronous>, transform_indices = @transform_3, window_bounds = array<i64: 8, 1>}, {pipeline_mode = #tpu.pipeline_mode<synchronous>, transform_indices = @transform_4, window_bounds = array<i64: 16, 72>}, {pipeline_mode = #tpu.pipeline_mode<synchronous>, transform_indices = @transform_5, window_bounds = array<i64: 16, 1>}, {transform_indices = @transform_6, window_bounds = array<i64: 16, 384>}]} {
    %c0 = arith.constant 0 : index
    %c0_0 = arith.constant 0 : index
    %0 = vector.load %arg2[%c0, %c0_0] : memref<1x384xf32, #tpu.memory_space<vmem>>, vector<1x384xf32>
    %c0_1 = arith.constant 0 : index
    %c0_2 = arith.constant 0 : index
    %1 = vector.load %arg1[%c0_1, %c0_2] : memref<4x384xf32, #tpu.memory_space<vmem>>, vector<4x384xf32>
    %c19_i32 = arith.constant 19 : i32
    %2 = tpu.dynamic_rotate %1 by %c19_i32 dim 1 : vector<4x384xf32>, i32 -> vector<4x384xf32>
    %c18_i32 = arith.constant 18 : i32
    %3 = tpu.dynamic_rotate %1 by %c18_i32 dim 1 : vector<4x384xf32>, i32 -> vector<4x384xf32>
    %c17_i32 = arith.constant 17 : i32
    %4 = tpu.dynamic_rotate %1 by %c17_i32 dim 1 : vector<4x384xf32>, i32 -> vector<4x384xf32>
    %c1_i32 = arith.constant 1 : i32
    %5 = tpu.dynamic_rotate %1 by %c1_i32 dim 1 : vector<4x384xf32>, i32 -> vector<4x384xf32>
    %c383_i32 = arith.constant 383 : i32
    %6 = tpu.dynamic_rotate %1 by %c383_i32 dim 1 : vector<4x384xf32>, i32 -> vector<4x384xf32>
    %c367_i32 = arith.constant 367 : i32
    %7 = tpu.dynamic_rotate %1 by %c367_i32 dim 1 : vector<4x384xf32>, i32 -> vector<4x384xf32>
    %c366_i32 = arith.constant 366 : i32
    %8 = tpu.dynamic_rotate %1 by %c366_i32 dim 1 : vector<4x384xf32>, i32 -> vector<4x384xf32>
    %c365_i32 = arith.constant 365 : i32
    %9 = tpu.dynamic_rotate %1 by %c365_i32 dim 1 : vector<4x384xf32>, i32 -> vector<4x384xf32>
    %10 = tpu.concatenate %2, %3, %4, %5, %1, %6, %7, %8, %9 in 0 : vector<4x384xf32>, vector<4x384xf32>, vector<4x384xf32>, vector<4x384xf32>, vector<4x384xf32>, vector<4x384xf32>, vector<4x384xf32>, vector<4x384xf32>, vector<4x384xf32> -> vector<36x384xf32>
    %c0_3 = arith.constant 0 : index
    %c0_4 = arith.constant 0 : index
    %11 = vector.load %arg3[%c0_3, %c0_4] : memref<8x36xbf16, #tpu.memory_space<vmem>>, vector<8x36xbf16>
    %12 = arith.truncf %10 : vector<36x384xf32> to vector<36x384xbf16>
    %cst = arith.constant dense<0.000000e+00> : vector<8x384xf32>
    %13 = tpu.matmul %11, %12, %cst {dimension_numbers = #tpu.dot_dimension_numbers<[1], [0], [0], [1], [0, 0, 1, 1], [], []>} : vector<8x36xbf16>, vector<36x384xbf16>, vector<8x384xf32> -> vector<8x384xf32>
    %c0_5 = arith.constant 0 : index
    %c0_6 = arith.constant 0 : index
    %14 = vector.load %arg4[%c0_5, %c0_6] : memref<8x1xf32, #tpu.memory_space<vmem>>, vector<8x1xf32>
    %15 = vector.broadcast %14 : vector<8x1xf32> to vector<8x384xf32>
    %16 = arith.addf %13, %15 : vector<8x384xf32>
    %cst_7 = arith.constant 0.000000e+00 : f32
    %17 = vector.broadcast %cst_7 : f32 to vector<8x384xf32>
    %18 = arith.maximumf %16, %17 : vector<8x384xf32>
    %19 = vector.broadcast %0 : vector<1x384xf32> to vector<8x384xf32>
    %20 = arith.mulf %18, %19 : vector<8x384xf32>
    %c19_i32_8 = arith.constant 19 : i32
    %21 = tpu.dynamic_rotate %20 by %c19_i32_8 dim 1 : vector<8x384xf32>, i32 -> vector<8x384xf32>
    %c18_i32_9 = arith.constant 18 : i32
    %22 = tpu.dynamic_rotate %20 by %c18_i32_9 dim 1 : vector<8x384xf32>, i32 -> vector<8x384xf32>
    %c17_i32_10 = arith.constant 17 : i32
    %23 = tpu.dynamic_rotate %20 by %c17_i32_10 dim 1 : vector<8x384xf32>, i32 -> vector<8x384xf32>
    %c1_i32_11 = arith.constant 1 : i32
    %24 = tpu.dynamic_rotate %20 by %c1_i32_11 dim 1 : vector<8x384xf32>, i32 -> vector<8x384xf32>
    %c383_i32_12 = arith.constant 383 : i32
    %25 = tpu.dynamic_rotate %20 by %c383_i32_12 dim 1 : vector<8x384xf32>, i32 -> vector<8x384xf32>
    %c367_i32_13 = arith.constant 367 : i32
    %26 = tpu.dynamic_rotate %20 by %c367_i32_13 dim 1 : vector<8x384xf32>, i32 -> vector<8x384xf32>
    %c366_i32_14 = arith.constant 366 : i32
    %27 = tpu.dynamic_rotate %20 by %c366_i32_14 dim 1 : vector<8x384xf32>, i32 -> vector<8x384xf32>
    %c365_i32_15 = arith.constant 365 : i32
    %28 = tpu.dynamic_rotate %20 by %c365_i32_15 dim 1 : vector<8x384xf32>, i32 -> vector<8x384xf32>
    %29 = tpu.concatenate %21, %22, %23, %24, %20, %25, %26, %27, %28 in 0 : vector<8x384xf32>, vector<8x384xf32>, vector<8x384xf32>, vector<8x384xf32>, vector<8x384xf32>, vector<8x384xf32>, vector<8x384xf32>, vector<8x384xf32>, vector<8x384xf32> -> vector<72x384xf32>
    %c0_16 = arith.constant 0 : index
    %c0_17 = arith.constant 0 : index
    %30 = vector.load %arg5[%c0_16, %c0_17] : memref<16x72xbf16, #tpu.memory_space<vmem>>, vector<16x72xbf16>
    %31 = arith.truncf %29 : vector<72x384xf32> to vector<72x384xbf16>
    %cst_18 = arith.constant dense<0.000000e+00> : vector<16x384xf32>
    %32 = tpu.matmul %30, %31, %cst_18 {dimension_numbers = #tpu.dot_dimension_numbers<[1], [0], [0], [1], [0, 0, 1, 1], [], []>} : vector<16x72xbf16>, vector<72x384xbf16>, vector<16x384xf32> -> vector<16x384xf32>
    %c0_19 = arith.constant 0 : index
    %c0_20 = arith.constant 0 : index
    %33 = vector.load %arg6[%c0_19, %c0_20] : memref<16x1xf32, #tpu.memory_space<vmem>>, vector<16x1xf32>
    %34 = vector.broadcast %33 : vector<16x1xf32> to vector<16x384xf32>
    %35 = arith.addf %32, %34 : vector<16x384xf32>
    %cst_21 = arith.constant 0.000000e+00 : f32
    %36 = vector.broadcast %cst_21 : f32 to vector<16x384xf32>
    %37 = arith.maximumf %35, %36 : vector<16x384xf32>
    %c0_22 = arith.constant 0 : index
    %c0_23 = arith.constant 0 : index
    %38 = vector.load %arg7[%c0_22, %c0_23] : memref<16x384xf32, #tpu.memory_space<vmem>>, vector<16x384xf32>
    tpu.vector_store %arg7[%c0_22, %c0_23], %37 {strides = array<i32>} : memref<16x384xf32, #tpu.memory_space<vmem>>, vector<16x384xf32>,
    return
  }
  func.func @transform_0(%arg0: i32) -> (i32, i32) {
    %c0_i32 = arith.constant 0 : i32
    %c0_i32_0 = arith.constant 0 : i32
    return %c0_i32, %arg0 : i32, i32
  }
  func.func @transform_1(%arg0: i32) -> (i32, i32) {
    %c0_i32 = arith.constant 0 : i32
    %c0_i32_0 = arith.constant 0 : i32
    %c0_i32_1 = arith.constant 0 : i32
    return %c0_i32, %c0_i32_0 : i32, i32
  }
  func.func @transform_2(%arg0: i32) -> (i32, i32) {
    %c0_i32 = arith.constant 0 : i32
    %c0_i32_0 = arith.constant 0 : i32
    %c0_i32_1 = arith.constant 0 : i32
    return %c0_i32, %c0_i32_0 : i32, i32
  }
  func.func @transform_3(%arg0: i32) -> (i32, i32) {
    %c0_i32 = arith.constant 0 : i32
    %c0_i32_0 = arith.constant 0 : i32
    %c0_i32_1 = arith.constant 0 : i32
    return %c0_i32, %c0_i32_0 : i32, i32
  }
  func.func @transform_4(%arg0: i32) -> (i32, i32) {
    %c0_i32 = arith.constant 0 : i32
    %c0_i32_0 = arith.constant 0 : i32
    %c0_i32_1 = arith.constant 0 : i32
    return %c0_i32, %c0_i32_0 : i32, i32
  }
  func.func @transform_5(%arg0: i32) -> (i32, i32) {
    %c0_i32 = arith.constant 0 : i32
    %c0_i32_0 = arith.constant 0 : i32
    %c0_i32_1 = arith.constant 0 : i32
    return %c0_i32, %c0_i32_0 : i32, i32
  }
  func.func @transform_6(%arg0: i32) -> (i32, i32) {
    %c0_i32 = arith.constant 0 : i32
    %c0_i32_0 = arith.constant 0 : i32
    return %c0_i32, %arg0 : i32, i32
  }
}

</mosaic_0001>

<llo_original>
// kernel: _lambda_.1
$region0: #{_lambda_.1}
  #allocation0 [shape = 'u32[]', space=smem, size = 0x4, offset = 0x4, fixed_abs, tag = 'smem constant byte address 0x4 - core index']
  #allocation1 [shape = 'u32[144,128]{1,0:T(1,128)}', space=vmem, size = 0x12000, scoped, tag = 'internal scratch']
  %s0 = inlined_call_operand.vmem [shape: f32[4,768], index: 0, kind: input, shape index: {}]
  %s1 = inlined_call_operand.vmem [shape: f32[1,384], index: 1, kind: input, shape index: {}]
  %s2 = inlined_call_operand.vmem [shape: bf16[8,36], index: 2, kind: input, shape index: {}]
  %s3 = inlined_call_operand.vmem [shape: f32[8,1], index: 3, kind: input, shape index: {}]
  %s4 = inlined_call_operand.vmem [shape: bf16[16,72], index: 4, kind: input, shape index: {}]
  %s5 = inlined_call_operand.vmem [shape: f32[16,1], index: 5, kind: input, shape index: {}]
  %s6 = inlined_call_operand.vmem [shape: f32[16,768], index: 6, kind: output, shape index: {}]
  %s7 = sld [smem:[#allocation0]]
  $region76: #{_lambda_.1} parent=0
    _
  %s9 = ssub.s32 1, %s7
  %s10 = scalar_select 0, %s9, %s7
  $region1: #{_lambda_.1} parent=0
    #allocation2 [shape = 'u8[49152]{0}', space=vmem, size = 0xc000, scoped, tag = 'output window, operand 0']
    loop: start=0, step=1, limit=4
    $region2: #{_lambda_.1} parent=1 // loop_pre_header
      _
    $region3: #{_lambda_.1} parent=1 // loop_header
      %s12 = sphi 0, %s16
      %p13 = scmp.ge.s32.totalorder %s12, 4
      %s22 = sphi 0, %s24
      %s25 = sphi 0, %s22
      %s26 = sphi 0, %s25
      %s42 = sphi 0, %s26
      %s46 = sphi 0, %s46
      %s48 = sphi 0, %s46
      %s49 = sphi 0, %s48
      %s63 = sphi 0, %s49
      %s67 = sphi 0, %s67
      %s69 = sphi 0, %s67
      %s70 = sphi 0, %s69
      %s84 = sphi 0, %s70
      %s88 = sphi 0, %s88
      %s90 = sphi 0, %s88
      %s91 = sphi 0, %s90
      %s105 = sphi 0, %s91
      %s109 = sphi 0, %s109
      %s111 = sphi 0, %s109
      %s112 = sphi 0, %s111
      %s126 = sphi 0, %s112
      %s130 = sphi 0, %s130
      %s132 = sphi 0, %s130
      %s133 = sphi 0, %s132
      %s147 = sphi 0, %s133
      %s153 = sphi 0, %s155
      %s156 = sphi 0, %s153
      %s157 = sphi 0, %s156
      %s173 = sphi 0, %s157
    $region4: #{_lambda_.1} parent=1 // loop_header_branch
      %15 = sbr.rel (%p13) target = $region8
    $region5: #{_lambda_.1} parent=1 // loop_body
      %s17 = ssub.s32 %s12, 1
      %s18 = ssub.s32 %s12, 2
      %s19 = sadd.s32 %s12, 1
      %s20 = ssub.s32 %s12, %s19
      %p21 = scmp.eq.s32.totalorder %s20, 0
      %s23 = sadd.s32 %s22, 1
      %s24 = scalar_select %p21, %s22, %s23
      %p27 = pneg %p21
      %p28 = scmp.eq.s32.totalorder %s12, 1
      %p29 = por %p27, %p28
      %p30 = scmp.ne.s32.totalorder %s22, %s25
      %p31 = scmp.eq.s32.totalorder %s12, 0
      %p32 = por %p30, %p31
      %p33 = scmp.ne.s32.totalorder %s22, %s25
      %p34 = scmp.eq.s32.totalorder %s17, 1
      %p35 = por %p33, %p34
      %p36 = scmp.ne.s32.totalorder %s25, %s26
      %p37 = scmp.eq.s32.totalorder %s17, 0
      %p38 = por %p36, %p37
      %p39 = scmp.ne.s32.totalorder %s25, %s26
      %p40 = scmp.eq.s32.totalorder %s18, 1
      %p41 = por %p39, %p40
      %p43 = scmp.ne.s32.totalorder %s26, %s42
      %p44 = scmp.eq.s32.totalorder %s18, 0
      %p45 = por %p43, %p44
      %s47 = sadd.s32 %s46, 1
      %p50 = scmp.eq.s32.totalorder %s12, 1
      %p51 = scmp.ne.s32.totalorder %s46, %s48
      %p52 = scmp.eq.s32.totalorder %s12, 0
      %p53 = por %p51, %p52
      %p54 = scmp.ne.s32.totalorder %s46, %s48
      %p55 = scmp.eq.s32.totalorder %s17, 1
      %p56 = por %p54, %p55
      %p57 = scmp.ne.s32.totalorder %s48, %s49
      %p58 = scmp.eq.s32.totalorder %s17, 0
      %p59 = por %p57, %p58
      %p60 = scmp.ne.s32.totalorder %s48, %s49
      %p61 = scmp.eq.s32.totalorder %s18, 1
      %p62 = por %p60, %p61
      %p64 = scmp.ne.s32.totalorder %s49, %s63
      %p65 = scmp.eq.s32.totalorder %s18, 0
      %p66 = por %p64, %p65
      %s68 = sadd.s32 %s67, 1
      %p71 = scmp.eq.s32.totalorder %s12, 1
      %p72 = scmp.ne.s32.totalorder %s67, %s69
      %p73 = scmp.eq.s32.totalorder %s12, 0
      %p74 = por %p72, %p73
      %p75 = scmp.ne.s32.totalorder %s67, %s69
      %p76 = scmp.eq.s32.totalorder %s17, 1
      %p77 = por %p75, %p76
      %p78 = scmp.ne.s32.totalorder %s69, %s70
      %p79 = scmp.eq.s32.totalorder %s17, 0
      %p80 = por %p78, %p79
      %p81 = scmp.ne.s32.totalorder %s69, %s70
      %p82 = scmp.eq.s32.totalorder %s18, 1
      %p83 = por %p81, %p82
      %p85 = scmp.ne.s32.totalorder %s70, %s84
      %p86 = scmp.eq.s32.totalorder %s18, 0
      %p87 = por %p85, %p86
      %s89 = sadd.s32 %s88, 1
      %p92 = scmp.eq.s32.totalorder %s12, 1
      %p93 = scmp.ne.s32.totalorder %s88, %s90
      %p94 = scmp.eq.s32.totalorder %s12, 0
      %p95 = por %p93, %p94
      %p96 = scmp.ne.s32.totalorder %s88, %s90
      %p97 = scmp.eq.s32.totalorder %s17, 1
      %p98 = por %p96, %p97
      %p99 = scmp.ne.s32.totalorder %s90, %s91
      %p100 = scmp.eq.s32.totalorder %s17, 0
      %p101 = por %p99, %p100
      %p102 = scmp.ne.s32.totalorder %s90, %s91
      %p103 = scmp.eq.s32.totalorder %s18, 1
      %p104 = por %p102, %p103
      %p106 = scmp.ne.s32.totalorder %s91, %s105
      %p107 = scmp.eq.s32.totalorder %s18, 0
      %p108 = por %p106, %p107
      %s110 = sadd.s32 %s109, 1
      %p113 = scmp.eq.s32.totalorder %s12, 1
      %p114 = scmp.ne.s32.totalorder %s109, %s111
      %p115 = scmp.eq.s32.totalorder %s12, 0
      %p116 = por %p114, %p115
      %p117 = scmp.ne.s32.totalorder %s109, %s111
      %p118 = scmp.eq.s32.totalorder %s17, 1
      %p119 = por %p117, %p118
      %p120 = scmp.ne.s32.totalorder %s111, %s112
      %p121 = scmp.eq.s32.totalorder %s17, 0
      %p122 = por %p120, %p121
      %p123 = scmp.ne.s32.totalorder %s111, %s112
      %p124 = scmp.eq.s32.totalorder %s18, 1
      %p125 = por %p123, %p124
      %p127 = scmp.ne.s32.totalorder %s112, %s126
      %p128 = scmp.eq.s32.totalorder %s18, 0
      %p129 = por %p127, %p128
      %s131 = sadd.s32 %s130, 1
      %p134 = scmp.eq.s32.totalorder %s12, 1
      %p135 = scmp.ne.s32.totalorder %s130, %s132
      %p136 = scmp.eq.s32.totalorder %s12, 0
      %p137 = por %p135, %p136
      %p138 = scmp.ne.s32.totalorder %s130, %s132
      %p139 = scmp.eq.s32.totalorder %s17, 1
      %p140 = por %p138, %p139
      %p141 = scmp.ne.s32.totalorder %s132, %s133
      %p142 = scmp.eq.s32.totalorder %s17, 0
      %p143 = por %p141, %p142
      %p144 = scmp.ne.s32.totalorder %s132, %s133
      %p145 = scmp.eq.s32.totalorder %s18, 1
      %p146 = por %p144, %p145
      %p148 = scmp.ne.s32.totalorder %s133, %s147
      %p149 = scmp.eq.s32.totalorder %s18, 0
      %p150 = por %p148, %p149
      %s151 = ssub.s32 %s12, %s19
      %p152 = scmp.eq.s32.totalorder %s151, 0
      %s154 = sadd.s32 %s153, 1
      %s155 = scalar_select %p152, %s153, %s154
      %p158 = pneg %p152
      %p159 = scmp.eq.s32.totalorder %s12, 1
      %p160 = por %p158, %p159
      %p161 = scmp.ne.s32.totalorder %s153, %s156
      %p162 = scmp.eq.s32.totalorder %s12, 0
      %p163 = por %p161, %p162
      %p164 = scmp.ne.s32.totalorder %s153, %s156
      %p165 = scmp.eq.s32.totalorder %s17, 1
      %p166 = por %p164, %p165
      %p167 = scmp.ne.s32.totalorder %s156, %s157
      %p168 = scmp.eq.s32.totalorder %s17, 0
      %p169 = por %p167, %p168
      %p170 = scmp.ne.s32.totalorder %s156, %s157
      %p171 = scmp.eq.s32.totalorder %s18, 1
      %p172 = por %p170, %p171
      %p174 = scmp.ne.s32.totalorder %s157, %s173
      %p175 = scmp.eq.s32.totalorder %s18, 0
      %p176 = por %p174, %p175
      %p177 = scmp.le.s32.totalorder 1, %s12
      %p178 = scmp.lt.s32.totalorder %s12, 3
      %p179 = pnand %p177, %p178
      %p180 = pneg %p179
      // Predicated region
      $region9: #{_lambda_.1} parent=5 // pred_check
        _
      $region10: #{_lambda_.1} parent=5 // pred_check_branch
        %182 = sbr.rel (%p179) target = $region12
      $region11: #{_lambda_.1} parent=5 // pred_region
        %s183 = ssub.s32 %s12, 1
        // Predicated region
        $region13: #{_lambda_.1} parent=11 // pred_check
          %p184 = pneg %p59
        $region14: #{_lambda_.1} parent=11 // pred_check_branch
          %186 = sbr.rel (%p184) target = $region16
        $region15: #{_lambda_.1} parent=11 // pred_region
          _
        $region16: #{_lambda_.1} parent=11 // pred_fallthru
          _
        // Predicated region
        $region17: #{_lambda_.1} parent=11 // pred_check
          %p187 = pneg %p80
        $region18: #{_lambda_.1} parent=11 // pred_check_branch
          %189 = sbr.rel (%p187) target = $region20
        $region19: #{_lambda_.1} parent=11 // pred_region
          _
        $region20: #{_lambda_.1} parent=11 // pred_fallthru
          _
        // Predicated region
        $region21: #{_lambda_.1} parent=11 // pred_check
          %p190 = pneg %p101
        $region22: #{_lambda_.1} parent=11 // pred_check_branch
          %192 = sbr.rel (%p190) target = $region24
        $region23: #{_lambda_.1} parent=11 // pred_region
          _
        $region24: #{_lambda_.1} parent=11 // pred_fallthru
          _
        // Predicated region
        $region25: #{_lambda_.1} parent=11 // pred_check
          %p193 = pneg %p122
        $region26: #{_lambda_.1} parent=11 // pred_check_branch
          %195 = sbr.rel (%p193) target = $region28
        $region27: #{_lambda_.1} parent=11 // pred_region
          _
        $region28: #{_lambda_.1} parent=11 // pred_fallthru
          _
        // Predicated region
        $region29: #{_lambda_.1} parent=11 // pred_check
          %p196 = pneg %p143
        $region30: #{_lambda_.1} parent=11 // pred_check_branch
          %198 = sbr.rel (%p196) target = $region32
        $region31: #{_lambda_.1} parent=11 // pred_region
          _
        $region32: #{_lambda_.1} parent=11 // pred_fallthru
          _
      $region12: #{_lambda_.1} parent=5 // pred_fallthru
        _
      %p199 = scmp.lt.s32.totalorder %s12, 2
      // Predicated region
      $region33: #{_lambda_.1} parent=5 // pred_check
        %p200 = pneg %p199
      $region34: #{_lambda_.1} parent=5 // pred_check_branch
        %202 = sbr.rel (%p200) target = $region36
      $region35: #{_lambda_.1} parent=5 // pred_region
        // Predicated region
        $region37: #{_lambda_.1} parent=35 // pred_check
          %p203 = pneg %p32
        $region38: #{_lambda_.1} parent=35 // pred_check_branch
          %205 = sbr.rel (%p203) target = $region40
        $region39: #{_lambda_.1} parent=35 // pred_region
          %s206 = smul.u32 3, %s12
          %p207 = scmp.lt.s32.totalorder %s206, 5
          %s208 = scalar_select %p207, %s206, 5
          %s209 = smul.addr %s208, 4
          %s210 = scalar_lea.vmem %s0, %s209
          %s211 = smul.u32 3, %s12
        $region40: #{_lambda_.1} parent=35 // pred_fallthru
          _
      $region36: #{_lambda_.1} parent=5 // pred_fallthru
        _
      %p212 = scmp.le.s32.totalorder 1, %s12
      %p213 = scmp.lt.s32.totalorder %s12, 3
      %p214 = pnand %p212, %p213
      %p215 = pneg %p214
      // Predicated region
      $region41: #{_lambda_.1} parent=5 // pred_check
        _
      $region42: #{_lambda_.1} parent=5 // pred_check_branch
        %217 = sbr.rel (%p214) target = $region44
      $region43: #{_lambda_.1} parent=5 // pred_region
        %s218 = ssub.s32 %s12, 1
        %s219 = smul.u32 3, %s17
        %p220 = scmp.lt.s32.totalorder %s219, 5
        %s221 = scalar_select %p220, %s219, 5
        %s222 = smul.addr %s221, 4
        %s223 = scalar_lea.vmem %s0, %s222
        %p224 = pneg %p38
        %p225 = pneg %p35
        %p226 = pneg %p59
        %p227 = pneg %p56
        %p228 = pneg %p80
        %p229 = pneg %p77
        %p230 = pneg %p101
        %p231 = pneg %p98
        %p232 = pneg %p122
        %p233 = pneg %p119
        %p234 = pneg %p143
        %p235 = pneg %p140
        %p236 = pneg %p169
        %p237 = pneg %p166
        %s238 = sand.u32 %s156, 1
        %s239 = sand.u32 %s156, 1
        %s240 = smul.addr %s239, 48
        %s241 = scalar_lea.vmem [#allocation2], %s240
        %s242 = smul.u32 3, %s17
        %p243 = scmp.lt.s32.totalorder %s242, 5
        %s244 = scalar_select %p243, %s242, 5
        %s245 = smul.addr %s244, 4
        %s246 = scalar_lea.vmem %s0, %s245
        %s247 = smul.u32 3, %s17
        %s248 = smul.u32 3, %s17
        %v250 = vld [vmem:[%s1] sm:$0x7]
        %v251 = vld [vmem:[%s246] sm:$0xff]
        %v252 = vld [vmem:[%s246 + $0x8] sm:$0xf]
        %v254 = vcombine.high %v251, %v251
        %256 = vrot.lane.b32.xlu0 %v251, 19
        %v257 = vpop.permute.xlu0 %256
        %258 = vrot.lane.b32.xlu0 %v254, 19
        %v259 = vpop.permute.xlu0 %258
        %260 = vrot.lane.b32.xlu0 %v252, 19
        %v261 = vpop.permute.xlu0 %260
        %v262 = vlaneseq
        %v263 = vand.u32 %v262, 127
        %vm264 = vcmp.lt.s32.totalorder %v263, 19
        %v265 = vsel %vm264, %v259, %v261
        %v266 = vsel %vm264, %v257, %v259
        %v267 = vsel %vm264, %v261, %v257
        %268 = vrot.lane.b32.xlu0 %v251, 18
        %v269 = vpop.permute.xlu0 %268
        %270 = vrot.lane.b32.xlu0 %v254, 18
        %v271 = vpop.permute.xlu0 %270
        %272 = vrot.lane.b32.xlu0 %v252, 18
        %v273 = vpop.permute.xlu0 %272
        %vm274 = vcmp.lt.s32.totalorder %v263, 18
        %v275 = vsel %vm274, %v271, %v273
        %v276 = vsel %vm274, %v269, %v271
        %v277 = vsel %vm274, %v273, %v269
        %278 = vrot.lane.b32.xlu0 %v251, 17
        %v279 = vpop.permute.xlu0 %278
        %280 = vrot.lane.b32.xlu0 %v254, 17
        %v281 = vpop.permute.xlu0 %280
        %282 = vrot.lane.b32.xlu0 %v252, 17
        %v283 = vpop.permute.xlu0 %282
        %vm284 = vcmp.lt.s32.totalorder %v263, 17
        %v285 = vsel %vm284, %v281, %v283
        %v286 = vsel %vm284, %v279, %v281
        %v287 = vsel %vm284, %v283, %v279
        %288 = vrot.lane.b32.xlu0 %v251, 1
        %v289 = vpop.permute.xlu0 %288
        %290 = vrot.lane.b32.xlu0 %v254, 1
        %v291 = vpop.permute.xlu0 %290
        %292 = vrot.lane.b32.xlu0 %v252, 1
        %v293 = vpop.permute.xlu0 %292
        %vm294 = vcmp.lt.s32.totalorder %v263, 1
        %v295 = vsel %vm294, %v291, %v293
        %v296 = vsel %vm294, %v289, %v291
        %v297 = vsel %vm294, %v293, %v289
        %298 = vrot.lane.b32.xlu0 %v251, 127
        %v299 = vpop.permute.xlu0 %298
        %300 = vrot.lane.b32.xlu0 %v254, 127
        %v301 = vpop.permute.xlu0 %300
        %302 = vrot.lane.b32.xlu0 %v252, 127
        %v303 = vpop.permute.xlu0 %302
        %vm304 = vcmp.lt.s32.totalorder %v263, 127
        %v305 = vsel %vm304, %v301, %v303
        %v306 = vsel %vm304, %v299, %v301
        %v307 = vsel %vm304, %v303, %v299
        %308 = vrot.lane.b32.xlu0 %v251, 111
        %v309 = vpop.permute.xlu0 %308
        %310 = vrot.lane.b32.xlu0 %v254, 111
        %v311 = vpop.permute.xlu0 %310
        %312 = vrot.lane.b32.xlu0 %v252, 111
        %v313 = vpop.permute.xlu0 %312
        %vm314 = vcmp.lt.s32.totalorder %v263, 111
        %v315 = vsel %vm314, %v311, %v313
        %v316 = vsel %vm314, %v309, %v311
        %v317 = vsel %vm314, %v313, %v309
        %318 = vrot.lane.b32.xlu0 %v251, 110
        %v319 = vpop.permute.xlu0 %318
        %320 = vrot.lane.b32.xlu0 %v254, 110
        %v321 = vpop.permute.xlu0 %320
        %322 = vrot.lane.b32.xlu0 %v252, 110
        %v323 = vpop.permute.xlu0 %322
        %vm324 = vcmp.lt.s32.totalorder %v263, 110
        %v325 = vsel %vm324, %v321, %v323
        %v326 = vsel %vm324, %v319, %v321
        %v327 = vsel %vm324, %v323, %v319
        %328 = vrot.lane.b32.xlu0 %v251, 109
        %v329 = vpop.permute.xlu0 %328
        %330 = vrot.lane.b32.xlu0 %v254, 109
        %v331 = vpop.permute.xlu0 %330
        %332 = vrot.lane.b32.xlu0 %v252, 109
        %v333 = vpop.permute.xlu0 %332
        %vm334 = vcmp.lt.s32.totalorder %v263, 109
        %v335 = vsel %vm334, %v331, %v333
        %v336 = vsel %vm334, %v329, %v331
        %v337 = vsel %vm334, %v333, %v329
        %v341 = vrot.slane %v277, 4
        %v342 = vrot.slane %v276, 4
        %v343 = vrot.slane %v275, 4
        %v350 = vrot.slane %v297, 4
        %v351 = vrot.slane %v296, 4
        %v352 = vrot.slane %v295, 4
        %v359 = vrot.slane %v306, 4
        %v360 = vrot.slane %v305, 4
        %v361 = vrot.slane %v307, 4
        %v368 = vrot.slane %v326, 4
        %v369 = vrot.slane %v325, 4
        %v370 = vrot.slane %v327, 4
        %vm374 = vcmask 1043456
        %v375 = vsel %vm374, %v267, %v341
        %v376 = vsel %vm374, %v266, %v342
        %v377 = vsel %vm374, %v265, %v343
        %v378 = vsel %vm374, %v287, %v350
        %v379 = vsel %vm374, %v286, %v351
        %v380 = vsel %vm374, %v285, %v352
        %v381 = vsel %vm374, %v251, %v359
        %v382 = vsel %vm374, %v254, %v360
        %v383 = vsel %vm374, %v252, %v361
        %v384 = vsel %vm374, %v316, %v368
        %v385 = vsel %vm374, %v315, %v369
        %v386 = vsel %vm374, %v317, %v370
        %v387 = vld [vmem:[%s2] sm:$0xf]
        %v388 = vpack.c.bf16 %v378, %v375
        %v389 = vpack.c.bf16 %v379, %v376
        %v390 = vpack.c.bf16 %v380, %v377
        %v391 = vpack.c.bf16 %v384, %v381
        %v392 = vpack.c.bf16 %v385, %v382
        %v393 = vpack.c.bf16 %v386, %v383
        %v394 = vpack.c.bf16 %v336, %v336
        %v395 = vpack.c.bf16 %v335, %v335
        %v396 = vpack.c.bf16 %v337, %v337
        %v397 = vld [vmem:[%s3] sm:$0xff]
        %399 = vset.pattern.permute.xlu0 0
        %400 = vperm.xlu0 %399, %v397
        %v401 = vpop.permute.xlu0 %400
        %vm403 = vcmask 293888
        %v405 = vsel %vm403, %v387, 0
        %vm407 = vcmask 1041408
        %v409 = vsel %vm407, %v394, 0
        %v412 = vsel %vm407, %v395, 0
        %v415 = vsel %vm407, %v396, 0
        %417 = vmatprep.subr.bf16.mxu0 %v389
        %418 = vmatpush1.bf16.msra.mxu0 %v388
        %419 = vmatprep.subr.bf16.mxu0 %v392
        %420 = vmatpush1.bf16.msra.mxu0 %v391
        %421 = vmatprep.subr.bf16.mxu0 %v412
        %422 = vmatpush1.bf16.msra.mxu0 %v409
        %423 = vmatprep.subr.bf16.mxu0 0
        %424 = vmatpush1.bf16.msra.mxu0 0
        %425 = vmatprep.subr.bf16.mxu0 0
        %426 = vmatpush1.bf16.msra.mxu0 0
        %427 = vmatprep.subr.bf16.mxu0 0
        %428 = vmatpush1.bf16.msra.mxu0 0
        %429 = vmatprep.subr.bf16.mxu0 0
        %430 = vmatpush1.bf16.msra.mxu0 0
        %431 = vmatprep.subr.bf16.mxu0 0
        %432 = vmatpush1.bf16.msra.mxu0 0
        %433 = vmatprep.subr.bf16.mxu0 0
        %434 = vmatpush1.bf16.msra.mxu0 0
        %435 = vmatprep.subr.bf16.mxu0 0
        %436 = vmatpush1.bf16.msra.mxu0 0
        %437 = vmatprep.subr.bf16.mxu0 0
        %438 = vmatpush1.bf16.msra.mxu0 0
        %439 = vmatprep.subr.bf16.mxu0 0
        %440 = vmatpush1.bf16.msra.mxu0 0
        %441 = vmatprep.subr.bf16.mxu0 0
        %442 = vmatpush1.bf16.msra.mxu0 0
        %443 = vmatprep.subr.bf16.mxu0 0
        %444 = vmatpush1.bf16.msra.mxu0 0
        %445 = vmatprep.subr.bf16.mxu0 0
        %446 = vmatpush1.bf16.msra.mxu0 0
        %447 = vmatprep.subr.bf16.mxu0 0
        %448 = vmatpush1.bf16.msra.mxu0 0
        %449 = vmatprep.mubr.bf16.mxu0 0
        %450 = vmatmul.mubr.bf16.gmra.mrb[0].mxu0 %v405
        %v451 = vpop.f32.mrb[0].mxu0
        %v452 = vadd.f32 %v401, %v451
        %v453 = vpop.f32.mrb[0].mxu0
        %v454 = vadd.f32 %v401, %v453
        %v455 = vpop.f32.mrb[0].mxu0
        %v456 = vpop.f32.mrb[0].mxu0
        %457 = vdwg.mxu0
        %458 = vmatprep.subr.bf16.mxu0 0
        %459 = vmatpush1.bf16.msra.mxu0 %v390
        %460 = vmatprep.subr.bf16.mxu0 0
        %461 = vmatpush1.bf16.msra.mxu0 %v393
        %462 = vmatprep.subr.bf16.mxu0 0
        %463 = vmatpush1.bf16.msra.mxu0 %v415
        %464 = vmatprep.subr.bf16.mxu0 0
        %465 = vmatpush1.bf16.msra.mxu0 0
        %466 = vmatprep.subr.bf16.mxu0 0
        %467 = vmatpush1.bf16.msra.mxu0 0
        %468 = vmatprep.subr.bf16.mxu0 0
        %469 = vmatpush1.bf16.msra.mxu0 0
        %470 = vmatprep.subr.bf16.mxu0 0
        %471 = vmatpush1.bf16.msra.mxu0 0
        %472 = vmatprep.subr.bf16.mxu0 0
        %473 = vmatpush1.bf16.msra.mxu0 0
        %474 = vmatprep.subr.bf16.mxu0 0
        %475 = vmatpush1.bf16.msra.mxu0 0
        %476 = vmatprep.subr.bf16.mxu0 0
        %477 = vmatpush1.bf16.msra.mxu0 0
        %478 = vmatprep.subr.bf16.mxu0 0
        %479 = vmatpush1.bf16.msra.mxu0 0
        %480 = vmatprep.subr.bf16.mxu0 0
        %481 = vmatpush1.bf16.msra.mxu0 0
        %482 = vmatprep.subr.bf16.mxu0 0
        %483 = vmatpush1.bf16.msra.mxu0 0
        %484 = vmatprep.subr.bf16.mxu0 0
        %485 = vmatpush1.bf16.msra.mxu0 0
        %486 = vmatprep.subr.bf16.mxu0 0
        %487 = vmatpush1.bf16.msra.mxu0 0
        %488 = vmatprep.subr.bf16.mxu0 0
        %489 = vmatpush1.bf16.msra.mxu0 0
        %490 = vmatprep.mubr.bf16.mxu0 0
        %491 = vmatmul.mubr.bf16.gmra.mrb[0].mxu0 %v405
        %v492 = vpop.f32.mrb[0].mxu0
        %v493 = vadd.f32 %v401, %v492
        %v494 = vpop.f32.mrb[0].mxu0
        %v495 = vpop.f32.mrb[0].mxu0
        %v496 = vpop.f32.mrb[0].mxu0
        %497 = vdwg.mxu0
        %v498 = vmax.f32 %v452, 0.0
        %v499 = vmax.f32 %v454, 0.0
        %v500 = vmax.f32 %v493, 0.0
        %v502 = vlaneseq
        %v503 = vshrl.u32 %v502, 7
        %v504 = vsub.s32 0, %v503
        %v505 = vrot.slane %v250, %v504
        %v506 = vlaneseq
        %v507 = vshrl.u32 %v506, 7
        %v508 = vsub.s32 1, %v507
        %v509 = vrot.slane %v250, %v508
        %v510 = vlaneseq
        %v511 = vshrl.u32 %v510, 7
        %v512 = vsub.s32 2, %v511
        %v513 = vrot.slane %v250, %v512
        %v517 = vmul.f32 %v498, %v505
        %v518 = vmul.f32 %v499, %v509
        %v519 = vmul.f32 %v500, %v513
        %520 = vrot.lane.b32.xlu0 %v517, 19
        %v521 = vpop.permute.xlu0 %520
        %522 = vrot.lane.b32.xlu0 %v518, 19
        %v523 = vpop.permute.xlu0 %522
        %524 = vrot.lane.b32.xlu0 %v519, 19
        %v525 = vpop.permute.xlu0 %524
        %v526 = vsel %vm264, %v523, %v525
        %v527 = vsel %vm264, %v521, %v523
        %v528 = vsel %vm264, %v525, %v521
        %529 = vrot.lane.b32.xlu0 %v517, 18
        %v530 = vpop.permute.xlu0 %529
        %531 = vrot.lane.b32.xlu0 %v518, 18
        %v532 = vpop.permute.xlu0 %531
        %533 = vrot.lane.b32.xlu0 %v519, 18
        %v534 = vpop.permute.xlu0 %533
        %v535 = vsel %vm274, %v532, %v534
        %v536 = vsel %vm274, %v530, %v532
        %v537 = vsel %vm274, %v534, %v530
        %538 = vrot.lane.b32.xlu0 %v517, 17
        %v539 = vpop.permute.xlu0 %538
        %540 = vrot.lane.b32.xlu0 %v518, 17
        %v541 = vpop.permute.xlu0 %540
        %542 = vrot.lane.b32.xlu0 %v519, 17
        %v543 = vpop.permute.xlu0 %542
        %v544 = vsel %vm284, %v541, %v543
        %v545 = vsel %vm284, %v539, %v541
        %v546 = vsel %vm284, %v543, %v539
        %547 = vrot.lane.b32.xlu0 %v517, 1
        %v548 = vpop.permute.xlu0 %547
        %549 = vrot.lane.b32.xlu0 %v518, 1
        %v550 = vpop.permute.xlu0 %549
        %551 = vrot.lane.b32.xlu0 %v519, 1
        %v552 = vpop.permute.xlu0 %551
        %v553 = vsel %vm294, %v550, %v552
        %v554 = vsel %vm294, %v548, %v550
        %v555 = vsel %vm294, %v552, %v548
        %556 = vrot.lane.b32.xlu0 %v517, 127
        %v557 = vpop.permute.xlu0 %556
        %558 = vrot.lane.b32.xlu0 %v518, 127
        %v559 = vpop.permute.xlu0 %558
        %560 = vrot.lane.b32.xlu0 %v519, 127
        %v561 = vpop.permute.xlu0 %560
        %v562 = vsel %vm304, %v559, %v561
        %v563 = vsel %vm304, %v557, %v559
        %v564 = vsel %vm304, %v561, %v557
        %565 = vrot.lane.b32.xlu0 %v517, 111
        %v566 = vpop.permute.xlu0 %565
        %567 = vrot.lane.b32.xlu0 %v518, 111
        %v568 = vpop.permute.xlu0 %567
        %569 = vrot.lane.b32.xlu0 %v519, 111
        %v570 = vpop.permute.xlu0 %569
        %v571 = vsel %vm314, %v568, %v570
        %v572 = vsel %vm314, %v566, %v568
        %v573 = vsel %vm314, %v570, %v566
        %574 = vrot.lane.b32.xlu0 %v517, 110
        %v575 = vpop.permute.xlu0 %574
        %576 = vrot.lane.b32.xlu0 %v518, 110
        %v577 = vpop.permute.xlu0 %576
        %578 = vrot.lane.b32.xlu0 %v519, 110
        %v579 = vpop.permute.xlu0 %578
        %v580 = vsel %vm324, %v577, %v579
        %v581 = vsel %vm324, %v575, %v577
        %v582 = vsel %vm324, %v579, %v575
        %583 = vrot.lane.b32.xlu0 %v517, 109
        %v584 = vpop.permute.xlu0 %583
        %585 = vrot.lane.b32.xlu0 %v518, 109
        %v586 = vpop.permute.xlu0 %585
        %587 = vrot.lane.b32.xlu0 %v519, 109
        %v588 = vpop.permute.xlu0 %587
        %v589 = vsel %vm334, %v586, %v588
        %v590 = vsel %vm334, %v584, %v586
        %v591 = vsel %vm334, %v588, %v584
        %v592 = vld [vmem:[%s4] sm:$0xf]
        %v593 = vld [vmem:[%s4 + $0x4] sm:$0xf]
        %v594 = vpack.c.bf16 %v537, %v528
        %v595 = vpack.c.bf16 %v536, %v527
        %v596 = vpack.c.bf16 %v535, %v526
        %v597 = vpack.c.bf16 %v555, %v546
        %v598 = vpack.c.bf16 %v554, %v545
        %v599 = vpack.c.bf16 %v553, %v544
        %v600 = vpack.c.bf16 %v563, %v517
        %v601 = vpack.c.bf16 %v562, %v518
        %v602 = vpack.c.bf16 %v564, %v519
        %v603 = vpack.c.bf16 %v581, %v572
        %v604 = vpack.c.bf16 %v580, %v571
        %v605 = vpack.c.bf16 %v582, %v573
        %v606 = vpack.c.bf16 %v590, %v590
        %v607 = vpack.c.bf16 %v589, %v589
        %v608 = vpack.c.bf16 %v591, %v591
        %v609 = vld [vmem:[%s5] sm:$0xff]
        %v610 = vld [vmem:[%s5 + $0x8] sm:$0xff]
        %612 = vset.pattern.permute.xlu0 0
        %613 = vperm.xlu0 %612, %v609
        %v614 = vpop.permute.xlu0 %613
        %617 = vset.pattern.permute.xlu0 0
        %618 = vperm.xlu0 %617, %v610
        %v619 = vpop.permute.xlu0 %618
        %v623 = vunpack.c.l.b16 %v592
        %v624 = vunpack.c.l.b16 %v593
        %v625 = vpack.c.b16 %v624, %v623
        %vm626 = vcmask 588800
        %v628 = vsel %vm626, %v625, 0
        %v631 = vsel %vm374, %v606, 0
        %v634 = vsel %vm374, %v607, 0
        %v637 = vsel %vm374, %v608, 0
        %639 = vmatprep.subr.bf16.mxu0 %v595
        %640 = vmatpush1.bf16.msra.mxu0 %v594
        %641 = vmatprep.subr.bf16.mxu0 %v598
        %642 = vmatpush1.bf16.msra.mxu0 %v597
        %643 = vmatprep.subr.bf16.mxu0 %v601
        %644 = vmatpush1.bf16.msra.mxu0 %v600
        %645 = vmatprep.subr.bf16.mxu0 %v604
        %646 = vmatpush1.bf16.msra.mxu0 %v603
        %647 = vmatprep.subr.bf16.mxu0 %v634
        %648 = vmatpush1.bf16.msra.mxu0 %v631
        %649 = vmatprep.subr.bf16.mxu0 0
        %650 = vmatpush1.bf16.msra.mxu0 0
        %651 = vmatprep.subr.bf16.mxu0 0
        %652 = vmatpush1.bf16.msra.mxu0 0
        %653 = vmatprep.subr.bf16.mxu0 0
        %654 = vmatpush1.bf16.msra.mxu0 0
        %655 = vmatprep.subr.bf16.mxu0 0
        %656 = vmatpush1.bf16.msra.mxu0 0
        %657 = vmatprep.subr.bf16.mxu0 0
        %658 = vmatpush1.bf16.msra.mxu0 0
        %659 = vmatprep.subr.bf16.mxu0 0
        %660 = vmatpush1.bf16.msra.mxu0 0
        %661 = vmatprep.subr.bf16.mxu0 0
        %662 = vmatpush1.bf16.msra.mxu0 0
        %663 = vmatprep.subr.bf16.mxu0 0
        %664 = vmatpush1.bf16.msra.mxu0 0
        %665 = vmatprep.subr.bf16.mxu0 0
        %666 = vmatpush1.bf16.msra.mxu0 0
        %667 = vmatprep.subr.bf16.mxu0 0
        %668 = vmatpush1.bf16.msra.mxu0 0
        %669 = vmatprep.subr.bf16.mxu0 0
        %670 = vmatpush1.bf16.msra.mxu0 0
        %671 = vmatprep.mubr.bf16.mxu0 0
        %672 = vmatmul.mubr.bf16.gmra.mrb[0].mxu0 %v628
        %v673 = vpop.f32.mrb[0].mxu0
        %v674 = vadd.f32 %v614, %v673
        %v675 = vpop.f32.mrb[0].mxu0
        %v676 = vadd.f32 %v614, %v675
        %v677 = vpop.f32.mrb[0].mxu0
        %v678 = vadd.f32 %v619, %v677
        %v679 = vpop.f32.mrb[0].mxu0
        %v680 = vadd.f32 %v619, %v679
        %681 = vdwg.mxu0
        %682 = vmatprep.subr.bf16.mxu0 0
        %683 = vmatpush1.bf16.msra.mxu0 %v596
        %684 = vmatprep.subr.bf16.mxu0 0
        %685 = vmatpush1.bf16.msra.mxu0 %v599
        %686 = vmatprep.subr.bf16.mxu0 0
        %687 = vmatpush1.bf16.msra.mxu0 %v602
        %688 = vmatprep.subr.bf16.mxu0 0
        %689 = vmatpush1.bf16.msra.mxu0 %v605
        %690 = vmatprep.subr.bf16.mxu0 0
        %691 = vmatpush1.bf16.msra.mxu0 %v637
        %692 = vmatprep.subr.bf16.mxu0 0
        %693 = vmatpush1.bf16.msra.mxu0 0
        %694 = vmatprep.subr.bf16.mxu0 0
        %695 = vmatpush1.bf16.msra.mxu0 0
        %696 = vmatprep.subr.bf16.mxu0 0
        %697 = vmatpush1.bf16.msra.mxu0 0
        %698 = vmatprep.subr.bf16.mxu0 0
        %699 = vmatpush1.bf16.msra.mxu0 0
        %700 = vmatprep.subr.bf16.mxu0 0
        %701 = vmatpush1.bf16.msra.mxu0 0
        %702 = vmatprep.subr.bf16.mxu0 0
        %703 = vmatpush1.bf16.msra.mxu0 0
        %704 = vmatprep.subr.bf16.mxu0 0
        %705 = vmatpush1.bf16.msra.mxu0 0
        %706 = vmatprep.subr.bf16.mxu0 0
        %707 = vmatpush1.bf16.msra.mxu0 0
        %708 = vmatprep.subr.bf16.mxu0 0
        %709 = vmatpush1.bf16.msra.mxu0 0
        %710 = vmatprep.subr.bf16.mxu0 0
        %711 = vmatpush1.bf16.msra.mxu0 0
        %712 = vmatprep.subr.bf16.mxu0 0
        %713 = vmatpush1.bf16.msra.mxu0 0
        %714 = vmatprep.mubr.bf16.mxu0 0
        %715 = vmatmul.mubr.bf16.gmra.mrb[0].mxu0 %v628
        %v716 = vpop.f32.mrb[0].mxu0
        %v717 = vadd.f32 %v614, %v716
        %v718 = vpop.f32.mrb[0].mxu0
        %v719 = vpop.f32.mrb[0].mxu0
        %v720 = vadd.f32 %v619, %v719
        %v721 = vpop.f32.mrb[0].mxu0
        %722 = vdwg.mxu0
        %v723 = vmax.f32 %v674, 0.0
        %v724 = vmax.f32 %v676, 0.0
        %v725 = vmax.f32 %v717, 0.0
        %v726 = vmax.f32 %v678, 0.0
        %v727 = vmax.f32 %v680, 0.0
        %v728 = vmax.f32 %v720, 0.0
        %729 = vst [vmem:[%s241] sm:$0xff] %v723
        %730 = vst [vmem:[%s241 + $0x8] sm:$0xff] %v724
        %731 = vst [vmem:[%s241 + $0x10] sm:$0xff] %v725
        %732 = vst [vmem:[%s241 + $0x18] sm:$0xff] %v726
        %733 = vst [vmem:[%s241 + $0x20] sm:$0xff] %v727
        %734 = vst [vmem:[%s241 + $0x28] sm:$0xff] %v728
        %s735 = sand.u32 %s156, 1
        %s736 = sand.u32 %s156, 1
        %s737 = smul.addr %s736, 48
        %s738 = scalar_lea.vmem [#allocation2], %s737
        // Predicated region
        $region45: #{_lambda_.1} parent=43 // pred_check
          %p739 = pneg %p166
        $region46: #{_lambda_.1} parent=43 // pred_check_branch
          %741 = sbr.rel (%p739) target = $region48
        $region47: #{_lambda_.1} parent=43 // pred_region
          %s742 = smul.u32 3, %s17
          %s743 = smul.addr %s742, 8
          %s744 = scalar_lea.vmem %s6, %s743
          // Predicated region
          $region49: #{_lambda_.1} parent=47 // pred_check
            _
          $region50: #{_lambda_.1} parent=47 // pred_check_branch
            %746 = sbr.rel (0) target = $region52
          $region51: #{_lambda_.1} parent=47 // pred_region
            // Predicated region
            $region53: #{_lambda_.1} parent=51 // pred_check
              _
            $region54: #{_lambda_.1} parent=51 // pred_check_branch
              %748 = sbr.rel (0) target = $region56
            $region55: #{_lambda_.1} parent=51 // pred_region
              loop: start=0, step=1, limit=1
              $region57: #{_lambda_.1} parent=55 // loop_pre_header
                _
              $region58: #{_lambda_.1} parent=55 // loop_header
                %s750 = sphi 0, %s754
                %p751 = scmp.ge.s32.totalorder %s750, 1
                %s755 = sphi %s738, %s738
                %s756 = sphi %s744, %s744
              $region59: #{_lambda_.1} parent=55 // loop_header_branch
                %753 = sbr.rel (%p751) target = $region63
              $region60: #{_lambda_.1} parent=55 // loop_body
                %v757 = vld [vmem:[%s755] sm:$0xff]
                %758 = vst [vmem:[%s756] sm:$0xff] %v757
                %v759 = vld [vmem:[%s755 + $0x8] sm:$0xff]
                %760 = vst [vmem:[%s756 + $0x8] sm:$0xff] %v759
                %v761 = vld [vmem:[%s755 + $0x10] sm:$0xff]
                %762 = vst [vmem:[%s756 + $0x10] sm:$0xff] %v761
                %v763 = vld [vmem:[%s755 + $0x18] sm:$0xff]
                %764 = vst [vmem:[%s756 + $0x30] sm:$0xff] %v763
                %v765 = vld [vmem:[%s755 + $0x20] sm:$0xff]
                %766 = vst [vmem:[%s756 + $0x38] sm:$0xff] %v765
                %v767 = vld [vmem:[%s755 + $0x28] sm:$0xff]
                %768 = vst [vmem:[%s756 + $0x40] sm:$0xff] %v767
              $region61: #{_lambda_.1} parent=55 // loop_footer
                %s754 = sadd.s32 1, %s750
              $region62: #{_lambda_.1} parent=55 // loop_footer_branch
                %749 = sbr.rel target = $region58
              $region63: #{_lambda_.1} parent=55 // loop_exit
                _
            $region56: #{_lambda_.1} parent=51 // pred_fallthru
              _
            // Predicated region
            $region64: #{_lambda_.1} parent=51 // pred_check
              _
            $region65: #{_lambda_.1} parent=51 // pred_check_branch
              %770 = sbr.rel target = $region67
            $region66: #{_lambda_.1} parent=51 // pred_region
              _
            $region67: #{_lambda_.1} parent=51 // pred_fallthru
              _
          $region52: #{_lambda_.1} parent=47 // pred_fallthru
            _
          %771 = vnop
        $region48: #{_lambda_.1} parent=43 // pred_fallthru
          _
      $region44: #{_lambda_.1} parent=5 // pred_fallthru
        _
      %p772 = scmp.le.s32.totalorder 2, %s12
      // Predicated region
      $region68: #{_lambda_.1} parent=5 // pred_check
        %p773 = pneg %p772
      $region69: #{_lambda_.1} parent=5 // pred_check_branch
        %775 = sbr.rel (%p773) target = $region71
      $region70: #{_lambda_.1} parent=5 // pred_region
        %s776 = ssub.s32 %s12, 2
        // Predicated region
        $region72: #{_lambda_.1} parent=70 // pred_check
          %p777 = pneg %p172
        $region73: #{_lambda_.1} parent=70 // pred_check_branch
          %779 = sbr.rel (%p777) target = $region75
        $region74: #{_lambda_.1} parent=70 // pred_region
          %s780 = sand.u32 %s157, 1
          %s781 = sand.u32 %s157, 1
          %s782 = smul.addr %s781, 48
          %s783 = scalar_lea.vmem [#allocation2], %s782
        $region75: #{_lambda_.1} parent=70 // pred_fallthru
          _
      $region71: #{_lambda_.1} parent=5 // pred_fallthru
        _
    $region6: #{_lambda_.1} parent=1 // loop_footer
      %s16 = sadd.s32 1, %s12
    $region7: #{_lambda_.1} parent=1 // loop_footer_branch
      %11 = sbr.rel target = $region3
    $region8: #{_lambda_.1} parent=1 // loop_exit
      _

</llo_original>
